<compile_context>
chip_gen: v7x
topology: tpu7x:2x2x1
jax: 0.10.0
libtpu: 0.0.40
codegen_flags: <defaults>
</compile_context>

<pallas_src>
import functools

import jax
import jax.numpy as jnp
from jax.experimental import pallas as pl
from jax.experimental.pallas import tpu as pltpu


def _round_up(x, m):
    return ((x + m - 1) // m) * m


def _default_tiles():
    """Per-generation tile defaults: bigger tiles on 128-MiB-VMEM chips (v5e/v6e),
    keep ~256x1024 on v7x (64 MiB physical VMEM, 2 TCs per chip)."""
    vmem = None
    try:
        info = pltpu.get_tpu_info()
        vmem = getattr(info, "vmem_capacity_bytes", None)
    except Exception:
        vmem = None
    if vmem is not None and vmem >= (96 << 20):
        return 256, 2048
    return 256, 1024


def _giou_loss_kernel(pred_ref, tgt_ref, out_ref, acc_ref, *, n_true, m_true, tn, tm):
    i = pl.program_id(0)
    j = pl.program_id(1)
    nj = pl.num_programs(1)

    # Per-row-tile accumulator: reset at the start of every j-sweep.
    @pl.when(j == 0)
    def _init():
        acc_ref[...] = jnp.zeros_like(acc_ref)

    pred = pred_ref[...].astype(jnp.float32)   # (tn, 4) xyxy
    tgt = tgt_ref[...].astype(jnp.float32)     # (4, tm) xyxy (transposed)

    px1 = pred[:, 0:1]   # (tn, 1)
    py1 = pred[:, 1:2]
    px2 = pred[:, 2:3]
    py2 = pred[:, 3:4]

    tx1 = tgt[0:1, :]    # (1, tm)
    ty1 = tgt[1:2, :]
    tx2 = tgt[2:3, :]
    ty2 = tgt[3:4, :]

    area_p = (px2 - px1) * (py2 - py1)   # (tn, 1)
    area_t = (tx2 - tx1) * (ty2 - ty1)   # (1, tm)

    # Pairwise intersection, broadcast to (tn, tm).
    iw = jnp.maximum(jnp.minimum(px2, tx2) - jnp.maximum(px1, tx1), 0.0)
    ih = jnp.maximum(jnp.minimum(py2, ty2) - jnp.maximum(py1, ty1), 0.0)
    inter = iw * ih                              # (tn, tm)

    union = area_p + area_t - inter              # (tn, tm)

    # Smallest enclosing box.  Valid xyxy boxes (x2 >= x1, y2 >= y1) guarantee
    # the extents are >= 0 (same assumption torchvision makes), so no clamp.
    ew = jnp.maximum(px2, tx2) - jnp.minimum(px1, tx1)
    eh = jnp.maximum(py2, ty2) - jnp.minimum(py1, ty1)
    enclose = ew * eh                            # (tn, tm)

    # EUP approximate reciprocals + one Newton-Raphson step (~1e-7 rel error),
    # keeps the divides off the saturated VALU slots.
    inv_union = pl.reciprocal(union, approx=True)
    inv_union = inv_union * (2.0 - union * inv_union)
    inv_enclose = pl.reciprocal(enclose, approx=True)
    inv_enclose = inv_enclose * (2.0 - enclose * inv_enclose)

    # loss = 1 - giou = 1 - iou + (enclose - union)/enclose
    #      = 2 - inter/union - union/enclose
    loss = 2.0 - inter * inv_union - union * inv_enclose    # (tn, tm)

    is_edge = ((i + 1) * tn > n_true) | ((j + 1) * tm > m_true)

    # Edge tiles: separable ragged-tail mask (one broadcast AND + one select) so
    # padded lanes/sublanes (possibly NaN/Inf) never reach the accumulator.
    @pl.when(is_edge)
    def _edge():
        row_ok = (jax.lax.broadcasted_iota(jnp.int32, (tn, 1), 0) + i * tn) < n_true
        col_ok = (jax.lax.broadcasted_iota(jnp.int32, (1, tm), 1) + j * tm) < m_true
        masked = jnp.where(row_ok & col_ok, loss, 0.0)
        acc_ref[...] += jnp.sum(masked, axis=0, keepdims=True)

    # Interior tiles (the vast majority on large grids): no masking at all.
    @pl.when(jnp.logical_not(is_edge))
    def _interior():
        acc_ref[...] += jnp.sum(loss, axis=0, keepdims=True)

    # Finalize this row-tile's partial sum once per j-sweep: single cross-lane
    # reduce, broadcast into an (8,128)-aligned output block for this i.
    @pl.when(j == nj - 1)
    def _finalize():
        total = jnp.sum(acc_ref[...])
        out_ref[...] = jnp.full((1, 8, 128), total, dtype=jnp.float32)


def giou_loss(pred, target, *, tn=None, tm=None):
    """pred: (N, 4) xyxy boxes, target: (M, 4) xyxy boxes -> scalar mean(1 - pairwise GIoU)."""
    n = pred.shape[0]
    m = target.shape[0]
    target_t = jnp.transpose(target)  # (4, M) glue transpose in plain JAX

    d_tn, d_tm = _default_tiles()
    tn = d_tn if tn is None else tn
    tm = d_tm if tm is None else tm

    # Tile sizes: sublane-multiple-of-8 on the N axis, lane-multiple-of-128 on M.
    tn = max(8, min(_round_up(tn, 8), _round_up(n, 8)))
    tm = max(128, min(_round_up(tm, 128), _round_up(m, 128)))
    grid = (pl.cdiv(n, tn), pl.cdiv(m, tm))  # M (lane) axis innermost

    kernel = functools.partial(_giou_loss_kernel, n_true=n, m_true=m, tn=tn, tm=tm)

    # Raise the scoped-VMEM limit only when the elementwise temps for a big tile
    # (v5e/v6e defaults) would not fit the per-generation default limit.
    est_temp_bytes = 12 * tn * tm * 4
    vmem_limit = (64 << 20) if est_temp_bytes > (12 << 20) else None

    out = pl.pallas_call(
        kernel,
        out_shape=jax.ShapeDtypeStruct((grid[0], 8, 128), jnp.float32),
        grid=grid,
        in_specs=[
            pl.BlockSpec((tn, 4), lambda i, j: (i, 0)),
            pl.BlockSpec((4, tm), lambda i, j: (0, j)),
        ],
        out_specs=pl.BlockSpec((1, 8, 128), lambda i, j: (i, 0, 0)),
        scratch_shapes=[pltpu.VMEM((1, tm), jnp.float32)],
        compiler_params=pltpu.CompilerParams(
            # Per-i partial sums -> the N-tile axis is safe to shard across
            # TensorCores; the M-tile axis feeds the per-i accumulator.
            dimension_semantics=("parallel", "arbitrary"),
            vmem_limit_bytes=vmem_limit,
        ),
    )(pred, target_t)

    partials = out[:, 0, 0]                      # (grid_i,) per-row-tile sums
    return jnp.sum(partials) / jnp.float32(n * m)


def _giou_loss_ref(pred, target):
    # pure-JAX reference mirroring torchvision.ops.generalized_box_iou semantics
    area1 = (pred[:, 2] - pred[:, 0]) * (pred[:, 3] - pred[:, 1])
    area2 = (target[:, 2] - target[:, 0]) * (target[:, 3] - target[:, 1])
    lt = jnp.maximum(pred[:, None, :2], target[None, :, :2])
    rb = jnp.minimum(pred[:, None, 2:], target[None, :, 2:])
    wh = jnp.maximum(rb - lt, 0.0)
    inter = wh[..., 0] * wh[..., 1]
    union = area1[:, None] + area2[None, :] - inter
    iou = inter / union
    lti = jnp.minimum(pred[:, None, :2], target[None, :, :2])
    rbi = jnp.maximum(pred[:, None, 2:], target[None, :, 2:])
    whi = jnp.maximum(rbi - lti, 0.0)
    areai = whi[..., 0] * whi[..., 1]
    giou = iou - (areai - union) / areai
    return jnp.mean(1.0 - giou)


if __name__ == "__main__":
    key = jax.random.PRNGKey(0)
    k1, k2, k3, k4 = jax.random.split(key, 4)

    # Small shapes chosen to exercise multi-tile grid, per-i partial sums,
    # the interior fast path (tile (0,0)) and ragged-tail masking (last tiles).
    N, M = 20, 300
    # Construct valid xyxy boxes deterministically (x2 > x1, y2 > y1).
    p_xy = jax.random.uniform(k1, (N, 2), jnp.float32) * 10.0
    p_wh = jax.random.uniform(k2, (N, 2), jnp.float32) * 5.0 + 0.1
    pred = jnp.concatenate([p_xy, p_xy + p_wh], axis=1)          # (N, 4)

    t_xy = jax.random.uniform(k3, (M, 2), jnp.float32) * 10.0
    t_wh = jax.random.uniform(k4, (M, 2), jnp.float32) * 5.0 + 0.1
    target = jnp.concatenate([t_xy, t_xy + t_wh], axis=1)        # (M, 4)

    ref = _giou_loss_ref(pred, target)

    # Small-tile path: grid (3, 3) -> interior fast path + edge masking + 3 partials.
    loss = giou_loss(pred, target, tn=8, tm=128)
    jax.block_until_ready(loss)
    assert jnp.allclose(loss, ref, rtol=1e-5, atol=1e-5), (loss, ref)

    # Default (per-generation large-tile) path on the same data.
    loss2 = giou_loss(pred, target)
    jax.block_until_ready(loss2)
    assert jnp.allclose(loss2, ref, rtol=1e-5, atol=1e-5), (loss2, ref)

    print("KERNEL_OK")
</pallas_src>

<mosaic_0001>
module attributes {stable_mosaic.version = 11 : i64} {
  func.func @_giou_loss_kernel(%arg0: i32, %arg1: i32, %arg2: memref<8x4xf32, #tpu.memory_space<vmem>>, %arg3: memref<4x128xf32, #tpu.memory_space<vmem>>, %arg4: memref<1x8x128xf32, #tpu.memory_space<vmem>>, %arg5: memref<1x128xf32, #tpu.memory_space<vmem>>) attributes {dimension_semantics = [#tpu.dimension_semantics<parallel>, #tpu.dimension_semantics<arbitrary>], iteration_bounds = array<i64: 3, 3>, scalar_prefetch = 0 : i64, scratch_operands = 1 : i64, tpu.core_type = #tpu.core_type<tc>, window_params = [{transform_indices = @transform_0, window_bounds = array<i64: 8, 4>}, {transform_indices = @transform_1, window_bounds = array<i64: 4, 128>}, {transform_indices = @transform_2, window_bounds = array<i64: 1, 8, 128>}]} {
    %c0_i32 = arith.constant 0 : i32
    %0 = arith.cmpi eq, %arg1, %c0_i32 : i32
    %1 = arith.extui %0 : i1 to i32
    %c0_i32_0 = arith.constant 0 : i32
    %2 = arith.cmpi ne, %1, %c0_i32_0 : i32
    scf.if %2 {
      %cst_12 = arith.constant 0.000000e+00 : f32
      %87 = vector.broadcast %cst_12 : f32 to vector<1x128xf32>
      %c0_13 = arith.constant 0 : index
      %c0_14 = arith.constant 0 : index
      %88 = vector.load %arg5[%c0_13, %c0_14] : memref<1x128xf32, #tpu.memory_space<vmem>>, vector<1x128xf32>
      tpu.vector_store %arg5[%c0_13, %c0_14], %87 {strides = array<i32>} : memref<1x128xf32, #tpu.memory_space<vmem>>, vector<1x128xf32>,
    } else {
    }
    %c0 = arith.constant 0 : index
    %c0_1 = arith.constant 0 : index
    %3 = vector.load %arg2[%c0, %c0_1] : memref<8x4xf32, #tpu.memory_space<vmem>>, vector<8x4xf32>
    %c0_2 = arith.constant 0 : index
    %c0_3 = arith.constant 0 : index
    %4 = vector.load %arg3[%c0_2, %c0_3] : memref<4x128xf32, #tpu.memory_space<vmem>>, vector<4x128xf32>
    %5 = vector.extract_strided_slice %3 {offsets = [0, 0], sizes = [8, 1], strides = [1, 1]} : vector<8x4xf32> to vector<8x1xf32>
    %6 = vector.extract_strided_slice %3 {offsets = [0, 1], sizes = [8, 1], strides = [1, 1]} : vector<8x4xf32> to vector<8x1xf32>
    %7 = vector.extract_strided_slice %3 {offsets = [0, 2], sizes = [8, 1], strides = [1, 1]} : vector<8x4xf32> to vector<8x1xf32>
    %8 = vector.extract_strided_slice %3 {offsets = [0, 3], sizes = [8, 1], strides = [1, 1]} : vector<8x4xf32> to vector<8x1xf32>
    %9 = vector.extract_strided_slice %4 {offsets = [0, 0], sizes = [1, 128], strides = [1, 1]} : vector<4x128xf32> to vector<1x128xf32>
    %10 = vector.extract_strided_slice %4 {offsets = [1, 0], sizes = [1, 128], strides = [1, 1]} : vector<4x128xf32> to vector<1x128xf32>
    %11 = vector.extract_strided_slice %4 {offsets = [2, 0], sizes = [1, 128], strides = [1, 1]} : vector<4x128xf32> to vector<1x128xf32>
    %12 = vector.extract_strided_slice %4 {offsets = [3, 0], sizes = [1, 128], strides = [1, 1]} : vector<4x128xf32> to vector<1x128xf32>
    %13 = arith.subf %7, %5 : vector<8x1xf32>
    %14 = arith.subf %8, %6 : vector<8x1xf32>
    %15 = arith.mulf %13, %14 : vector<8x1xf32>
    %16 = arith.subf %11, %9 : vector<1x128xf32>
    %17 = arith.subf %12, %10 : vector<1x128xf32>
    %18 = arith.mulf %16, %17 : vector<1x128xf32>
    %19 = vector.broadcast %7 : vector<8x1xf32> to vector<8x128xf32>
    %20 = vector.broadcast %11 : vector<1x128xf32> to vector<8x128xf32>
    %21 = arith.minimumf %19, %20 : vector<8x128xf32>
    %22 = vector.broadcast %5 : vector<8x1xf32> to vector<8x128xf32>
    %23 = vector.broadcast %9 : vector<1x128xf32> to vector<8x128xf32>
    %24 = arith.maximumf %22, %23 : vector<8x128xf32>
    %25 = arith.subf %21, %24 : vector<8x128xf32>
    %cst = arith.constant 0.000000e+00 : f32
    %26 = vector.broadcast %cst : f32 to vector<8x128xf32>
    %27 = arith.maximumf %25, %26 : vector<8x128xf32>
    %28 = vector.broadcast %8 : vector<8x1xf32> to vector<8x128xf32>
    %29 = vector.broadcast %12 : vector<1x128xf32> to vector<8x128xf32>
    %30 = arith.minimumf %28, %29 : vector<8x128xf32>
    %31 = vector.broadcast %6 : vector<8x1xf32> to vector<8x128xf32>
    %32 = vector.broadcast %10 : vector<1x128xf32> to vector<8x128xf32>
    %33 = arith.maximumf %31, %32 : vector<8x128xf32>
    %34 = arith.subf %30, %33 : vector<8x128xf32>
    %cst_4 = arith.constant 0.000000e+00 : f32
    %35 = vector.broadcast %cst_4 : f32 to vector<8x128xf32>
    %36 = arith.maximumf %34, %35 : vector<8x128xf32>
    %37 = arith.mulf %27, %36 : vector<8x128xf32>
    %38 = vector.broadcast %15 : vector<8x1xf32> to vector<8x128xf32>
    %39 = vector.broadcast %18 : vector<1x128xf32> to vector<8x128xf32>
    %40 = arith.addf %38, %39 : vector<8x128xf32>
    %41 = arith.subf %40, %37 : vector<8x128xf32>
    %42 = vector.broadcast %7 : vector<8x1xf32> to vector<8x128xf32>
    %43 = vector.broadcast %11 : vector<1x128xf32> to vector<8x128xf32>
    %44 = arith.maximumf %42, %43 : vector<8x128xf32>
    %45 = vector.broadcast %5 : vector<8x1xf32> to vector<8x128xf32>
    %46 = vector.broadcast %9 : vector<1x128xf32> to vector<8x128xf32>
    %47 = arith.minimumf %45, %46 : vector<8x128xf32>
    %48 = arith.subf %44, %47 : vector<8x128xf32>
    %49 = vector.broadcast %8 : vector<8x1xf32> to vector<8x128xf32>
    %50 = vector.broadcast %12 : vector<1x128xf32> to vector<8x128xf32>
    %51 = arith.maximumf %49, %50 : vector<8x128xf32>
    %52 = vector.broadcast %6 : vector<8x1xf32> to vector<8x128xf32>
    %53 = vector.broadcast %10 : vector<1x128xf32> to vector<8x128xf32>
    %54 = arith.minimumf %52, %53 : vector<8x128xf32>
    %55 = arith.subf %51, %54 : vector<8x128xf32>
    %56 = arith.mulf %48, %55 : vector<8x128xf32>
    %57 = tpu.reciprocal %41 {approx = true} : vector<8x128xf32> -> vector<8x128xf32>
    %58 = arith.mulf %41, %57 : vector<8x128xf32>
    %cst_5 = arith.constant 2.000000e+00 : f32
    %59 = vector.broadcast %cst_5 : f32 to vector<8x128xf32>
    %60 = arith.subf %59, %58 : vector<8x128xf32>
    %61 = arith.mulf %57, %60 : vector<8x128xf32>
    %62 = tpu.reciprocal %56 {approx = true} : vector<8x128xf32> -> vector<8x128xf32>
    %63 = arith.mulf %56, %62 : vector<8x128xf32>
    %cst_6 = arith.constant 2.000000e+00 : f32
    %64 = vector.broadcast %cst_6 : f32 to vector<8x128xf32>
    %65 = arith.subf %64, %63 : vector<8x128xf32>
    %66 = arith.mulf %62, %65 : vector<8x128xf32>
    %67 = arith.mulf %37, %61 : vector<8x128xf32>
    %cst_7 = arith.constant 2.000000e+00 : f32
    %68 = vector.broadcast %cst_7 : f32 to vector<8x128xf32>
    %69 = arith.subf %68, %67 : vector<8x128xf32>
    %70 = arith.mulf %41, %66 : vector<8x128xf32>
    %71 = arith.subf %69, %70 : vector<8x128xf32>
    %c1_i32 = arith.constant 1 : i32
    %72 = arith.addi %arg0, %c1_i32 : i32
    %c8_i32 = arith.constant 8 : i32
    %73 = arith.muli %72, %c8_i32 : i32
    %c20_i32 = arith.constant 20 : i32
    %74 = arith.cmpi sgt, %73, %c20_i32 : i32
    %c1_i32_8 = arith.constant 1 : i32
    %75 = arith.addi %arg1, %c1_i32_8 : i32
    %c128_i32 = arith.constant 128 : i32
    %76 = arith.muli %75, %c128_i32 : i32
    %c300_i32 = arith.constant 300 : i32
    %77 = arith.cmpi sgt, %76, %c300_i32 : i32
    %78 = arith.ori %74, %77 : i1
    %79 = arith.extui %78 : i1 to i32
    %c0_i32_9 = arith.constant 0 : i32
    %80 = arith.cmpi ne, %79, %c0_i32_9 : i32
    scf.if %80 {
      %87 = tpu.iota {dimensions = array<i32: 0>} : vector<8x1xi32>
      %c8_i32_12 = arith.constant 8 : i32
      %88 = arith.muli %arg0, %c8_i32_12 : i32
      %89 = vector.broadcast %88 : i32 to vector<8x1xi32>
      %90 = arith.addi %87, %89 : vector<8x1xi32>
      %c20_i32_13 = arith.constant 20 : i32
      %91 = vector.broadcast %c20_i32_13 : i32 to vector<8x1xi32>
      %92 = arith.cmpi slt, %90, %91 : vector<8x1xi32>
      %93 = tpu.iota {dimensions = array<i32: 1>} : vector<1x128xi32>
      %c128_i32_14 = arith.constant 128 : i32
      %94 = arith.muli %arg1, %c128_i32_14 : i32
      %95 = vector.broadcast %94 : i32 to vector<1x128xi32>
      %96 = arith.addi %93, %95 : vector<1x128xi32>
      %c300_i32_15 = arith.constant 300 : i32
      %97 = vector.broadcast %c300_i32_15 : i32 to vector<1x128xi32>
      %98 = arith.cmpi slt, %96, %97 : vector<1x128xi32>
      %99 = vector.broadcast %92 : vector<8x1xi1> to vector<8x128xi1>
      %100 = vector.broadcast %98 : vector<1x128xi1> to vector<8x128xi1>
      %101 = arith.andi %99, %100 : vector<8x128xi1>
      %cst_16 = arith.constant 0.000000e+00 : f32
      %102 = vector.broadcast %cst_16 : f32 to vector<8x128xf32>
      %103 = arith.select %101, %71, %102 : vector<8x128xi1>, vector<8x128xf32>
      %c0_17 = arith.constant 0 : index
      %c0_18 = arith.constant 0 : index
      %104 = vector.load %arg5[%c0_17, %c0_18] : memref<1x128xf32, #tpu.memory_space<vmem>>, vector<1x128xf32>
      %cst_19 = arith.constant dense<0.000000e+00> : vector<128xf32>
      %105 = vector.multi_reduction <add>, %103, %cst_19 [0] : vector<8x128xf32> to vector<128xf32>
      %106 = vector.shape_cast %105 : vector<128xf32> to vector<1x128xf32>
      %107 = arith.addf %104, %106 : vector<1x128xf32>
      %c0_20 = arith.constant 0 : index
      %c0_21 = arith.constant 0 : index
      %108 = vector.load %arg5[%c0_20, %c0_21] : memref<1x128xf32, #tpu.memory_space<vmem>>, vector<1x128xf32>
      tpu.vector_store %arg5[%c0_20, %c0_21], %107 {strides = array<i32>} : memref<1x128xf32, #tpu.memory_space<vmem>>, vector<1x128xf32>,
    } else {
    }
    %true = arith.constant true
    %81 = arith.xori %78, %true : i1
    %82 = arith.extui %81 : i1 to i32
    %c0_i32_10 = arith.constant 0 : i32
    %83 = arith.cmpi ne, %82, %c0_i32_10 : i32
    scf.if %83 {
      %c0_12 = arith.constant 0 : index
      %c0_13 = arith.constant 0 : index
      %87 = vector.load %arg5[%c0_12, %c0_13] : memref<1x128xf32, #tpu.memory_space<vmem>>, vector<1x128xf32>
      %cst_14 = arith.constant dense<0.000000e+00> : vector<128xf32>
      %88 = vector.multi_reduction <add>, %71, %cst_14 [0] : vector<8x128xf32> to vector<128xf32>
      %89 = vector.shape_cast %88 : vector<128xf32> to vector<1x128xf32>
      %90 = arith.addf %87, %89 : vector<1x128xf32>
      %c0_15 = arith.constant 0 : index
      %c0_16 = arith.constant 0 : index
      %91 = vector.load %arg5[%c0_15, %c0_16] : memref<1x128xf32, #tpu.memory_space<vmem>>, vector<1x128xf32>
      tpu.vector_store %arg5[%c0_15, %c0_16], %90 {strides = array<i32>} : memref<1x128xf32, #tpu.memory_space<vmem>>, vector<1x128xf32>,
    } else {
    }
    %c2_i32 = arith.constant 2 : i32
    %84 = arith.cmpi eq, %arg1, %c2_i32 : i32
    %85 = arith.extui %84 : i1 to i32
    %c0_i32_11 = arith.constant 0 : i32
    %86 = arith.cmpi ne, %85, %c0_i32_11 : i32
    scf.if %86 {
      %c0_12 = arith.constant 0 : index
      %c0_13 = arith.constant 0 : index
      %87 = vector.load %arg5[%c0_12, %c0_13] : memref<1x128xf32, #tpu.memory_space<vmem>>, vector<1x128xf32>
      %88 = vector.shape_cast %87 : vector<1x128xf32> to vector<1x1x128xf32>
      %cst_14 = arith.constant dense<0.000000e+00> : vector<1xf32>
      %89 = vector.multi_reduction <add>, %88, %cst_14 [1, 2] : vector<1x1x128xf32> to vector<1xf32>
      %90 = vector.shape_cast %89 : vector<1xf32> to vector<1x1x1xf32>
      %91 = vector.extract %90[0, 0, 0] : f32 from vector<1x1x1xf32>
      %92 = vector.broadcast %91 : f32 to vector<1x8x128xf32>
      %c0_15 = arith.constant 0 : index
      %c0_16 = arith.constant 0 : index
      %c0_17 = arith.constant 0 : index
      %93 = vector.load %arg4[%c0_15, %c0_16, %c0_17] : memref<1x8x128xf32, #tpu.memory_space<vmem>>, vector<1x8x128xf32>
      tpu.vector_store %arg4[%c0_15, %c0_16, %c0_17], %92 {strides = array<i32>} : memref<1x8x128xf32, #tpu.memory_space<vmem>>, vector<1x8x128xf32>,
    } else {
    }
    return
  }
  func.func @transform_0(%arg0: i32, %arg1: i32) -> (i32, i32) {
    %c0_i32 = arith.constant 0 : i32
    %c0_i32_0 = arith.constant 0 : i32
    return %arg0, %c0_i32 : i32, i32
  }
  func.func @transform_1(%arg0: i32, %arg1: i32) -> (i32, i32) {
    %c0_i32 = arith.constant 0 : i32
    %c0_i32_0 = arith.constant 0 : i32
    return %c0_i32, %arg1 : i32, i32
  }
  func.func @transform_2(%arg0: i32, %arg1: i32) -> (i32, i32, i32) {
    %c0_i32 = arith.constant 0 : i32
    %c0_i32_0 = arith.constant 0 : i32
    %c0_i32_1 = arith.constant 0 : i32
    return %arg0, %c0_i32, %c0_i32_0 : i32, i32, i32
  }
}

</mosaic_0001>

<llo_original>
// kernel: tpu_custom_call.1
$region0: #{tpu_custom_call.1}
  #allocation0 [shape = 'u32[]', space=smem, size = 0x4, offset = 0x4, fixed_abs, tag = 'smem constant byte address 0x4 - core index']
  #allocation1 [shape = 'u32[144,128]{1,0:T(1,128)}', space=vmem, size = 0x12000, scoped, tag = 'internal scratch']
  #allocation2 [shape = 'f32[1,128]{1,0:T(1,128)}', space=vmem, size = 0x200, scoped, tag = 'scratch operand']
  %s0 = inlined_call_operand.vmem [shape: f32[20,4], index: 0, kind: input, shape index: {}]
  %s1 = inlined_call_operand.vmem [shape: f32[4,300], index: 1, kind: input, shape index: {}]
  %s2 = inlined_call_operand.hbm [shape: f32[3,8,128], index: 2, kind: output, shape index: {}]
  %s3 = sld [smem:[#allocation0]]
  $region57: #{tpu_custom_call.1} parent=0
    _
  %s5 = ssub.s32 1, %s3
  %s6 = scalar_select 0, %s5, %s3
  $region1: #{tpu_custom_call.1} parent=0
    #allocation3 [shape = 'u8[8192]{0}', space=vmem, size = 0x2000, scoped, tag = 'output window, operand 0']
    #allocation4 [shape = 's32[2]{0}', space=sflag, size = 0x8, scoped, tag = 'scoped memory for tpu_custom_call.1']
    %7 = vsyncpa [#allocation4], 0
    %s8 = scalar_lea.sflag [#allocation4], 1
    %9 = vsyncpa %s8, 0
    loop: start=0, step=1, limit=11
    $region2: #{tpu_custom_call.1} parent=1 // loop_pre_header
      _
    $region3: #{tpu_custom_call.1} parent=1 // loop_header
      %s11 = sphi 0, %s15
      %p12 = scmp.ge.s32.totalorder %s11, 11
      %s18 = sphi 0, %s30
      %s19 = sphi 0, %s26
      %s20 = sphi 0, %s18
      %s21 = sphi 0, %s19
      %s22 = sphi 0, %s20
      %s23 = sphi 0, %s21
      %s33 = sphi 0, %s35
      %s36 = sphi 0, %s33
      %s37 = sphi 0, %s36
      %s53 = sphi 0, %s37
      %s59 = sphi 0, %s61
      %s62 = sphi 0, %s59
      %s63 = sphi 0, %s62
      %s79 = sphi 0, %s63
      %s85 = sphi 0, %s87
      %s88 = sphi 0, %s85
      %s89 = sphi 0, %s88
      %s105 = sphi 0, %s89
    $region4: #{tpu_custom_call.1} parent=1 // loop_header_branch
      %14 = sbr.rel (%p12) target = $region8
    $region5: #{tpu_custom_call.1} parent=1 // loop_body
      %s16 = ssub.s32 %s11, 1
      %s17 = ssub.s32 %s11, 2
      %s24 = sadd.s32 1, %s19
      %p25 = scmp.ge.s32.totalorder %s24, 3
      %s26 = scalar_select %p25, 0, %s24
      %s27 = sadd.s32 1, %s18
      %s28 = scalar_select %p25, %s27, %s18
      %p29 = scmp.ge.s32.totalorder %s28, 3
      %s30 = scalar_select %p29, 0, %s28
      %s31 = ssub.s32 %s18, %s30
      %p32 = scmp.eq.s32.totalorder %s31, 0
      %s34 = sadd.s32 %s33, 1
      %s35 = scalar_select %p32, %s33, %s34
      %p38 = pneg %p32
      %p39 = scmp.eq.s32.totalorder %s11, 8
      %p40 = por %p38, %p39
      %p41 = scmp.ne.s32.totalorder %s33, %s36
      %p42 = scmp.eq.s32.totalorder %s11, 0
      %p43 = por %p41, %p42
      %p44 = scmp.ne.s32.totalorder %s33, %s36
      %p45 = scmp.eq.s32.totalorder %s16, 8
      %p46 = por %p44, %p45
      %p47 = scmp.ne.s32.totalorder %s36, %s37
      %p48 = scmp.eq.s32.totalorder %s16, 0
      %p49 = por %p47, %p48
      %p50 = scmp.ne.s32.totalorder %s36, %s37
      %p51 = scmp.eq.s32.totalorder %s17, 8
      %p52 = por %p50, %p51
      %p54 = scmp.ne.s32.totalorder %s37, %s53
      %p55 = scmp.eq.s32.totalorder %s17, 0
      %p56 = por %p54, %p55
      %s57 = ssub.s32 %s19, %s26
      %p58 = scmp.eq.s32.totalorder %s57, 0
      %s60 = sadd.s32 %s59, 1
      %s61 = scalar_select %p58, %s59, %s60
      %p64 = pneg %p58
      %p65 = scmp.eq.s32.totalorder %s11, 8
      %p66 = por %p64, %p65
      %p67 = scmp.ne.s32.totalorder %s59, %s62
      %p68 = scmp.eq.s32.totalorder %s11, 0
      %p69 = por %p67, %p68
      %p70 = scmp.ne.s32.totalorder %s59, %s62
      %p71 = scmp.eq.s32.totalorder %s16, 8
      %p72 = por %p70, %p71
      %p73 = scmp.ne.s32.totalorder %s62, %s63
      %p74 = scmp.eq.s32.totalorder %s16, 0
      %p75 = por %p73, %p74
      %p76 = scmp.ne.s32.totalorder %s62, %s63
      %p77 = scmp.eq.s32.totalorder %s17, 8
      %p78 = por %p76, %p77
      %p80 = scmp.ne.s32.totalorder %s63, %s79
      %p81 = scmp.eq.s32.totalorder %s17, 0
      %p82 = por %p80, %p81
      %s83 = ssub.s32 %s18, %s30
      %p84 = scmp.eq.s32.totalorder %s83, 0
      %s86 = sadd.s32 %s85, 1
      %s87 = scalar_select %p84, %s85, %s86
      %p90 = pneg %p84
      %p91 = scmp.eq.s32.totalorder %s11, 8
      %p92 = por %p90, %p91
      %p93 = scmp.ne.s32.totalorder %s85, %s88
      %p94 = scmp.eq.s32.totalorder %s11, 0
      %p95 = por %p93, %p94
      %p96 = scmp.ne.s32.totalorder %s85, %s88
      %p97 = scmp.eq.s32.totalorder %s16, 8
      %p98 = por %p96, %p97
      %p99 = scmp.ne.s32.totalorder %s88, %s89
      %p100 = scmp.eq.s32.totalorder %s16, 0
      %p101 = por %p99, %p100
      %p102 = scmp.ne.s32.totalorder %s88, %s89
      %p103 = scmp.eq.s32.totalorder %s17, 8
      %p104 = por %p102, %p103
      %p106 = scmp.ne.s32.totalorder %s89, %s105
      %p107 = scmp.eq.s32.totalorder %s17, 0
      %p108 = por %p106, %p107
      %p109 = scmp.le.s32.totalorder 1, %s11
      %p110 = scmp.lt.s32.totalorder %s11, 10
      %p111 = pnand %p109, %p110
      %p112 = pneg %p111
      // Predicated region
      $region9: #{tpu_custom_call.1} parent=5 // pred_check
        _
      $region10: #{tpu_custom_call.1} parent=5 // pred_check_branch
        %114 = sbr.rel (%p111) target = $region12
      $region11: #{tpu_custom_call.1} parent=5 // pred_region
        %s115 = ssub.s32 %s11, 1
      $region12: #{tpu_custom_call.1} parent=5 // pred_fallthru
        _
      %p116 = scmp.lt.s32.totalorder %s11, 9
      // Predicated region
      $region13: #{tpu_custom_call.1} parent=5 // pred_check
        %p117 = pneg %p116
      $region14: #{tpu_custom_call.1} parent=5 // pred_check_branch
        %119 = sbr.rel (%p117) target = $region16
      $region15: #{tpu_custom_call.1} parent=5 // pred_region
        // Predicated region
        $region17: #{tpu_custom_call.1} parent=15 // pred_check
          %p120 = pneg %p43
        $region18: #{tpu_custom_call.1} parent=15 // pred_check_branch
          %122 = sbr.rel (%p120) target = $region20
        $region19: #{tpu_custom_call.1} parent=15 // pred_region
          %p123 = scmp.lt.s32.totalorder %s18, 2
          %s124 = scalar_select %p123, %s18, 2
          %s125 = smul.addr %s124, 8
          %s126 = scalar_lea.vmem %s0, %s125
        $region20: #{tpu_custom_call.1} parent=15 // pred_fallthru
          _
        // Predicated region
        $region21: #{tpu_custom_call.1} parent=15 // pred_check
          %p127 = pneg %p69
        $region22: #{tpu_custom_call.1} parent=15 // pred_check_branch
          %129 = sbr.rel (%p127) target = $region24
        $region23: #{tpu_custom_call.1} parent=15 // pred_region
          %p130 = scmp.lt.s32.totalorder %s19, 2
          %s131 = scalar_select %p130, %s19, 2
          %s132 = smul.addr %s131, 4
          %s133 = scalar_lea.vmem %s1, %s132
        $region24: #{tpu_custom_call.1} parent=15 // pred_fallthru
          _
      $region16: #{tpu_custom_call.1} parent=5 // pred_fallthru
        _
      %p134 = scmp.le.s32.totalorder 1, %s11
      %p135 = scmp.lt.s32.totalorder %s11, 10
      %p136 = pnand %p134, %p135
      %p137 = pneg %p136
      // Predicated region
      $region25: #{tpu_custom_call.1} parent=5 // pred_check
        _
      $region26: #{tpu_custom_call.1} parent=5 // pred_check_branch
        %139 = sbr.rel (%p136) target = $region28
      $region27: #{tpu_custom_call.1} parent=5 // pred_region
        %s140 = ssub.s32 %s11, 1
        %p141 = scmp.lt.s32.totalorder %s20, 2
        %s142 = scalar_select %p141, %s20, 2
        %s143 = smul.addr %s142, 8
        %s144 = scalar_lea.vmem %s0, %s143
        %p145 = pneg %p49
        %p146 = pneg %p46
        %p147 = scmp.lt.s32.totalorder %s21, 2
        %s148 = scalar_select %p147, %s21, 2
        %s149 = smul.addr %s148, 4
        %s150 = scalar_lea.vmem %s1, %s149
        %p151 = pneg %p75
        %p152 = pneg %p72
        %p153 = pneg %p101
        %p154 = pneg %p98
        %s155 = sand.u32 %s88, 1
        %s156 = scalar_lea.sflag [#allocation4], %s155
        %s157 = sand.u32 %s88, 1
        %s158 = smul.addr %s157, 8
        %s159 = scalar_lea.vmem [#allocation3], %s158
        %p160 = scmp.lt.s32.totalorder %s20, 2
        %s161 = scalar_select %p160, %s20, 2
        %s162 = smul.addr %s161, 8
        %s163 = scalar_lea.vmem %s0, %s162
        %p164 = scmp.lt.s32.totalorder %s21, 2
        %s165 = scalar_select %p164, %s21, 2
        %s166 = smul.addr %s165, 4
        %s167 = scalar_lea.vmem %s1, %s166
        %p168 = scmp.eq.s32.totalorder %s21, 0
        // Predicated region
        $region29: #{tpu_custom_call.1} parent=27 // pred_check
          %p169 = pneg %p168
        $region30: #{tpu_custom_call.1} parent=27 // pred_check_branch
          %171 = sbr.rel (%p169) target = $region32
        $region31: #{tpu_custom_call.1} parent=27 // pred_region
          %172 = vst [vmem:[#allocation2] sm:$0x1] 0.0
        $region32: #{tpu_custom_call.1} parent=27 // pred_fallthru
          _
        %v173 = vld [vmem:[%s163] sm:$0xff]
        %v174 = vld [vmem:[%s167] sm:$0xf]
        %176 = vrot.lane.b32.xlu0 %v173, 2
        %v177 = vpop.permute.xlu0 %176
        %v179 = vsub.f32 %v173, %v177
        %181 = vrot.lane.b32.xlu0 %v179, 127
        %v182 = vpop.permute.xlu0 %181
        %v184 = vmul.f32 %v179, %v182
        %v186 = vrot.slane %v174, 6
        %v188 = vsub.f32 %v174, %v186
        %v190 = vrot.slane %v188, 1
        %v192 = vmul.f32 %v188, %v190
        %193 = vset.pattern.permute.xlu0 2
        %194 = vperm.xlu0 %193, %v173
        %v195 = vpop.permute.xlu0 %194
        %v197 = vlaneseq
        %v198 = vshrl.u32 %v197, 7
        %v199 = vsub.s32 2, %v198
        %v200 = vrot.slane %v174, %v199
        %v201 = vmin.f32 %v195, %v200
        %202 = vset.pattern.permute.xlu0 0
        %203 = vperm.xlu0 %202, %v173
        %v204 = vpop.permute.xlu0 %203
        %v206 = vlaneseq
        %v207 = vshrl.u32 %v206, 7
        %v208 = vsub.s32 0, %v207
        %v209 = vrot.slane %v174, %v208
        %v210 = vmax.f32 %v204, %v209
        %v211 = vsub.f32 %v201, %v210
        %v212 = vmax.f32 %v211, 0.0
        %213 = vset.pattern.permute.xlu0 3
        %214 = vperm.xlu0 %213, %v173
        %v215 = vpop.permute.xlu0 %214
        %v217 = vlaneseq
        %v218 = vshrl.u32 %v217, 7
        %v219 = vsub.s32 3, %v218
        %v220 = vrot.slane %v174, %v219
        %v221 = vmin.f32 %v215, %v220
        %222 = vset.pattern.permute.xlu0 1
        %223 = vperm.xlu0 %222, %v173
        %v224 = vpop.permute.xlu0 %223
        %v226 = vlaneseq
        %v227 = vshrl.u32 %v226, 7
        %v228 = vsub.s32 1, %v227
        %v229 = vrot.slane %v174, %v228
        %v230 = vmax.f32 %v224, %v229
        %v231 = vsub.f32 %v221, %v230
        %v232 = vmax.f32 %v231, 0.0
        %v233 = vmul.f32 %v212, %v232
        %235 = vset.pattern.permute.xlu0 2
        %236 = vperm.xlu0 %235, %v184
        %v237 = vpop.permute.xlu0 %236
        %v239 = vlaneseq
        %v240 = vshrl.u32 %v239, 7
        %v241 = vsub.s32 2, %v240
        %v242 = vrot.slane %v192, %v241
        %v243 = vadd.f32 %v237, %v242
        %v244 = vsub.f32 %v243, %v233
        %v245 = vmax.f32 %v195, %v200
        %v246 = vmin.f32 %v204, %v209
        %v247 = vsub.f32 %v245, %v246
        %v248 = vmax.f32 %v215, %v220
        %v249 = vmin.f32 %v224, %v229
        %v250 = vsub.f32 %v248, %v249
        %v251 = vmul.f32 %v247, %v250
        %v252 = vrcp.pop %v244
        %v253 = vmul.f32 %v244, %v252
        %v254 = vsub.f32 2.0, %v253
        %v255 = vmul.f32 %v252, %v254
        %v256 = vrcp.pop %v251
        %v257 = vmul.f32 %v251, %v256
        %v258 = vsub.f32 2.0, %v257
        %v259 = vmul.f32 %v256, %v258
        %v260 = vmul.f32 %v233, %v255
        %v261 = vsub.f32 2.0, %v260
        %v262 = vmul.f32 %v244, %v259
        %v263 = vsub.f32 %v261, %v262
        %s264 = sadd.s32 %s20, 1
        %s265 = smul.u32 %s264, 8
        %p266 = scmp.gt.s32.totalorder %s265, 20
        %s267 = sadd.s32 %s21, 1
        %s268 = smul.u32 %s267, 128
        %p269 = scmp.gt.s32.totalorder %s268, 300
        %p270 = por %p266, %p269
        // Predicated region
        $region33: #{tpu_custom_call.1} parent=27 // pred_check
          %p271 = pneg %p270
        $region34: #{tpu_custom_call.1} parent=27 // pred_check_branch
          %273 = sbr.rel (%p271) target = $region36
        $region35: #{tpu_custom_call.1} parent=27 // pred_region
          %v274 = vlaneseq
          %v275 = vshrl.u32 %v274, 7
          %s276 = smul.u32 %s20, 8
          %v277 = vstv %s276
          %v278 = vadd.s32 %v275, %v277
          %vm279 = vcmp.lt.s32.totalorder %v278, 20
          %v280 = vlaneseq
          %v281 = vand.u32 %v280, 127
          %s282 = smul.u32 %s21, 128
          %v283 = vstv %s282
          %v284 = vadd.s32 %v281, %v283
          %vm285 = vcmp.lt.s32.totalorder %v284, 300
          %v286 = vsel %vm279, 1, 0
          %vm287 = vcmp.eq.s32.totalorder %v286, 1
          %v288 = vsel %vm285, 1, 0
          %vm289 = vcmp.eq.s32.totalorder %v288, 1
          %vm290 = vmand %vm287, %vm289
          %v291 = vsel %vm290, %v263, 0.0
          %v292 = vld [vmem:[#allocation2] sm:$0x1]
          %v293 = vrot.slane %v291, 4
          %v294 = vadd.f32 %v291, %v293
          %v295 = vrot.slane %v294, 2
          %v296 = vadd.f32 %v294, %v295
          %v297 = vrot.slane %v296, 1
          %v298 = vadd.f32 %v296, %v297
          %v299 = vadd.f32 %v292, %v298
          %300 = vst [vmem:[#allocation2] sm:$0x1] %v299
        $region36: #{tpu_custom_call.1} parent=27 // pred_fallthru
          _
        %p301 = pneg %p270
        // Predicated region
        $region37: #{tpu_custom_call.1} parent=27 // pred_check
          _
        $region38: #{tpu_custom_call.1} parent=27 // pred_check_branch
          %303 = sbr.rel (%p270) target = $region40
        $region39: #{tpu_custom_call.1} parent=27 // pred_region
          %v304 = vld [vmem:[#allocation2] sm:$0x1]
          %v305 = vrot.slane %v263, 4
          %v306 = vadd.f32 %v263, %v305
          %v307 = vrot.slane %v306, 2
          %v308 = vadd.f32 %v306, %v307
          %v309 = vrot.slane %v308, 1
          %v310 = vadd.f32 %v308, %v309
          %v311 = vadd.f32 %v304, %v310
          %312 = vst [vmem:[#allocation2] sm:$0x1] %v311
        $region40: #{tpu_custom_call.1} parent=27 // pred_fallthru
          _
        %p313 = scmp.eq.s32.totalorder %s21, 2
        // Predicated region
        $region41: #{tpu_custom_call.1} parent=27 // pred_check
          %p314 = pneg %p313
        $region42: #{tpu_custom_call.1} parent=27 // pred_check_branch
          %316 = sbr.rel (%p314) target = $region44
        $region43: #{tpu_custom_call.1} parent=27 // pred_region
          %v317 = vld [vmem:[#allocation2] sm:$0x1]
          %vm318 = vcmask 1040384
          %v319 = vsel %vm318, %v317, 0.0
          %320 = vadd.xlane.f32.xlu0 %v319
          %v321 = vpop.xlane.xlu0 %320
          %v322 = vrot.slane %v321, 4
          %v323 = vadd.f32 %v321, %v322
          %v324 = vrot.slane %v323, 2
          %v325 = vadd.f32 %v323, %v324
          %v326 = vrot.slane %v325, 1
          %v327 = vadd.f32 %v325, %v326
          %s328 = vtos %v327
          %v329 = vstv %s328
          %330 = vst [vmem:[%s159] sm:$0xff] %v329
        $region44: #{tpu_custom_call.1} parent=27 // pred_fallthru
          _
        %s331 = sand.u32 %s88, 1
        %s332 = scalar_lea.sflag [#allocation4], %s331
        %s333 = sand.u32 %s88, 1
        %s334 = smul.addr %s333, 8
        %s335 = scalar_lea.vmem [#allocation3], %s334
        // Predicated region
        $region45: #{tpu_custom_call.1} parent=27 // pred_check
          %p336 = pneg %p98
        $region46: #{tpu_custom_call.1} parent=27 // pred_check_branch
          %338 = sbr.rel (%p336) target = $region48
        $region47: #{tpu_custom_call.1} parent=27 // pred_region
          %s340 = ssub.s32 128, 128
          %341 = vsyncadd %s332, %s340
          %s342 = smul.addr %s20, 128
          %s343 = scalar_lea.hbm %s2, %s342
          %s345 = sshll.u32 %s335, 4
          %s346 = int_to_ptr.vmem [resolvable:$true] %s345
          %348 = dma.vmem_to_hbm [thread:$0]  %s346, 128, %s343, %s332
        $region48: #{tpu_custom_call.1} parent=27 // pred_fallthru
          _
      $region28: #{tpu_custom_call.1} parent=5 // pred_fallthru
        _
      %p349 = scmp.le.s32.totalorder 2, %s11
      // Predicated region
      $region49: #{tpu_custom_call.1} parent=5 // pred_check
        %p350 = pneg %p349
      $region50: #{tpu_custom_call.1} parent=5 // pred_check_branch
        %352 = sbr.rel (%p350) target = $region52
      $region51: #{tpu_custom_call.1} parent=5 // pred_region
        %s353 = ssub.s32 %s11, 2
        // Predicated region
        $region53: #{tpu_custom_call.1} parent=51 // pred_check
          %p354 = pneg %p104
        $region54: #{tpu_custom_call.1} parent=51 // pred_check_branch
          %356 = sbr.rel (%p354) target = $region56
        $region55: #{tpu_custom_call.1} parent=51 // pred_region
          %s357 = sand.u32 %s89, 1
          %s358 = scalar_lea.sflag [#allocation4], %s357
          %s359 = sand.u32 %s89, 1
          %s360 = smul.addr %s359, 8
          %s361 = scalar_lea.vmem [#allocation3], %s360
          %362 = dma.done %s358, 128
        $region56: #{tpu_custom_call.1} parent=51 // pred_fallthru
          _
      $region52: #{tpu_custom_call.1} parent=5 // pred_fallthru
        _
    $region6: #{tpu_custom_call.1} parent=1 // loop_footer
      %s15 = sadd.s32 1, %s11
    $region7: #{tpu_custom_call.1} parent=1 // loop_footer_branch
      %10 = sbr.rel target = $region3
    $region8: #{tpu_custom_call.1} parent=1 // loop_exit
      _
    %363 = vsyncpa [#allocation4], 1
    %s364 = scalar_lea.sflag [#allocation4], 1
    %365 = vsyncpa %s364, 1

</llo_original>
